<compile_context>
chip_gen: v7x
topology: tpu7x:2x2x1
jax: 0.10.0
libtpu: 0.0.40
codegen_flags: <defaults>
</compile_context>

<pallas_src>
import jax
import jax.numpy as jnp
from jax.experimental import pallas as pl
from jax.experimental.pallas import tpu as pltpu


def _round_up(x, m):
    return (x + m - 1) // m * m


def _value_mlp_kernel(state_ref, action_ref, w1s_ref, w1a_ref, b12_ref,
                      w2_ref, w3_ref, b3_ref, o_ref):
    """Fused value MLP on one (TB, .) batch tile.

    state_ref : (TB, S)        action_ref : (TB, A)
    w1s_ref   : (S, H)         w1a_ref    : (A, H)
    b12_ref   : (2, H)         row 0 = b1, row 1 = b2
    w2_ref    : (H, H)
    w3_ref    : (1, H)         fc3 weight as a row
    b3_ref    : (1,) SMEM      fc3 bias scalar
    o_ref     : (1, TB)        batch-lane-dense output row
    """
    b12 = b12_ref[...]
    b1 = b12[0:1, :]
    b2 = b12[1:2, :]

    # Layer 1: split-concat matmul (no materialized concat).
    h1 = (jnp.dot(state_ref[...], w1s_ref[...],
                  preferred_element_type=jnp.float32)
          + jnp.dot(action_ref[...], w1a_ref[...],
                    preferred_element_type=jnp.float32)
          + b1)
    h1 = jnp.maximum(h1, 0.0)

    # Layer 2.
    h2 = jnp.dot(h1, w2_ref[...], preferred_element_type=jnp.float32) + b2
    h2 = jnp.maximum(h2, 0.0)

    # Layer 3: contract H between w3 (1, H) and h2 (TB, H) -> (1, TB) row.
    # Output is lane-dense along the batch axis (unmasked vst, ~128x less
    # HBM writeback than a lane-padded (TB, 128) tile).
    row = jax.lax.dot_general(
        w3_ref[...], h2,
        dimension_numbers=(((1,), (1,)), ((), ())),
        preferred_element_type=jnp.float32)
    o_ref[...] = (row + b3_ref[0]).astype(o_ref.dtype)


def pack_params(params, state_dim, action_dim):
    """One-time repack of PyTorch-layout params into the kernel layout."""
    w1t = params["w1"].T                       # (S+A, H)
    w1s = w1t[:state_dim]                      # (S, H)
    w1a = w1t[state_dim:]                      # (A, H)
    w2t = params["w2"].T                       # (H, H)
    b12 = jnp.stack([params["b1"], params["b2"]], axis=0)       # (2, H)
    w3row = params["w3"].astype(jnp.float32)                    # (1, H)
    b3 = params["b3"].astype(jnp.float32).reshape((1,))         # (1,) scalar

    return {"w1s": w1s, "w1a": w1a, "b12": b12, "w2t": w2t,
            "w3": w3row, "b3": b3}


def value_network_forward(state, action, packed, *, block_b=1024):
    """state: (B, S) f32, action: (B, A) f32, packed: output of pack_params."""
    B, S = state.shape
    A = action.shape[1]
    H = packed["w2t"].shape[0]

    if B <= block_b:
        # Single grid step; full-extent blocks, no padding at all.
        TB = B
        Bp = B
    else:
        # Multi-tile: keep padding < TB (avoid near-2x padding for unlucky B)
        # and keep TB a multiple of 128 so the (1, TB) output block is a
        # lane-aligned unmasked store.
        num_tiles = pl.cdiv(B, block_b)
        TB = _round_up(pl.cdiv(B, num_tiles), 128)
        Bp = _round_up(B, TB)
        state = jnp.pad(state, ((0, Bp - B), (0, 0)))
        action = jnp.pad(action, ((0, Bp - B), (0, 0)))

    grid = (Bp // TB,)

    flops = 2 * Bp * ((S + A) * H + H * H + H)
    bytes_accessed = 4 * (Bp * (S + A + 1)              # activations in + out
                          + (S + A) * H + 2 * H         # w1, b1/b2
                          + H * H + H + 1)              # w2, w3, b3

    out = pl.pallas_call(
        _value_mlp_kernel,
        out_shape=jax.ShapeDtypeStruct((1, Bp), jnp.float32),
        grid=grid,
        in_specs=[
            pl.BlockSpec((TB, S), lambda i: (i, 0)),    # state   (tiled)
            pl.BlockSpec((TB, A), lambda i: (i, 0)),    # action  (tiled)
            pl.BlockSpec((S, H), lambda i: (0, 0)),     # w1[:S]  resident
            pl.BlockSpec((A, H), lambda i: (0, 0)),     # w1[S:]  resident
            pl.BlockSpec((2, H), lambda i: (0, 0)),     # b1/b2   resident
            pl.BlockSpec((H, H), lambda i: (0, 0)),     # w2      resident
            pl.BlockSpec((1, H), lambda i: (0, 0)),     # w3 row  resident
            pl.BlockSpec(memory_space=pltpu.MemorySpace.SMEM),  # b3 scalar
        ],
        out_specs=pl.BlockSpec((1, TB), lambda i: (0, i)),
        compiler_params=pltpu.CompilerParams(
            dimension_semantics=("parallel",)),
        cost_estimate=pl.CostEstimate(
            flops=flops, transcendentals=0, bytes_accessed=bytes_accessed),
    )(state, action, packed["w1s"], packed["w1a"], packed["b12"],
      packed["w2t"], packed["w3"], packed["b3"])

    return out[0, :B, None]


def init_params(key, state_dim, hidden_dim, action_dim):
    """PyTorch-layout params: weights ~ N(0, 0.3) (as in __init__),
    biases ~ U(-1/sqrt(fan_in), 1/sqrt(fan_in)) (PyTorch Linear default)."""
    ks = jax.random.split(key, 6)
    in1 = state_dim + action_dim

    def _bias(k, fan_in, n):
        bound = 1.0 / jnp.sqrt(jnp.float32(fan_in))
        return jax.random.uniform(k, (n,), jnp.float32, -bound, bound)

    return {
        "w1": 0.3 * jax.random.normal(ks[0], (hidden_dim, in1), jnp.float32),
        "b1": _bias(ks[1], in1, hidden_dim),
        "w2": 0.3 * jax.random.normal(ks[2], (hidden_dim, hidden_dim), jnp.float32),
        "b2": _bias(ks[3], hidden_dim, hidden_dim),
        "w3": 0.3 * jax.random.normal(ks[4], (1, hidden_dim), jnp.float32),
        "b3": _bias(ks[5], hidden_dim, 1),
    }


if __name__ == "__main__":
    state_dim, hidden_dim, action_dim = 12, 32, 4

    key = jax.random.PRNGKey(0)
    k_params, k_state, k_action = jax.random.split(key, 3)

    params = init_params(k_params, state_dim, hidden_dim, action_dim)
    packed = pack_params(params, state_dim, action_dim)   # one-time repack

    def ref_forward(s, a):
        cat = jnp.concatenate([s, a], axis=1)
        h1 = jax.nn.relu(cat @ params["w1"].T + params["b1"])
        h2 = jax.nn.relu(h1 @ params["w2"].T + params["b2"])
        return h2 @ params["w3"].T + params["b3"]

    # Small batch: single grid step, full-extent blocks, no padding.
    batch = 8
    state = jax.random.normal(k_state, (batch, state_dim), jnp.float32)
    action = jax.random.normal(k_action, (batch, action_dim), jnp.float32)
    out = jax.block_until_ready(value_network_forward(state, action, packed))
    assert out.shape == (batch, 1), out.shape
    ref = ref_forward(state, action)
    assert jnp.allclose(out, ref, atol=1e-5, rtol=1e-5), (
        jnp.max(jnp.abs(out - ref)))

    # Larger batch: exercises the multi-tile grid + padded path (grid > 1).
    big = 2500
    kb_s, kb_a = jax.random.split(jax.random.PRNGKey(1))
    state_b = jax.random.normal(kb_s, (big, state_dim), jnp.float32)
    action_b = jax.random.normal(kb_a, (big, action_dim), jnp.float32)
    out_b = jax.block_until_ready(
        value_network_forward(state_b, action_b, packed))
    assert out_b.shape == (big, 1), out_b.shape
    ref_b = ref_forward(state_b, action_b)
    assert jnp.allclose(out_b, ref_b, atol=1e-4, rtol=1e-4), (
        jnp.max(jnp.abs(out_b - ref_b)))

    print("KERNEL_OK")
</pallas_src>

<mosaic_0001>
module attributes {stable_mosaic.version = 11 : i64} {
  func.func @_value_mlp_kernel(%arg0: i32, %arg1: memref<8x12xf32, #tpu.memory_space<vmem>>, %arg2: memref<8x4xf32, #tpu.memory_space<vmem>>, %arg3: memref<12x32xf32, #tpu.memory_space<vmem>>, %arg4: memref<4x32xf32, #tpu.memory_space<vmem>>, %arg5: memref<2x32xf32, #tpu.memory_space<vmem>>, %arg6: memref<32x32xf32, #tpu.memory_space<vmem>>, %arg7: memref<1x32xf32, #tpu.memory_space<vmem>>, %arg8: memref<1xf32, #tpu.memory_space<smem>>, %arg9: memref<1x8xf32, #tpu.memory_space<vmem>>) attributes {dimension_semantics = [#tpu.dimension_semantics<parallel>], iteration_bounds = array<i64: 1>, scalar_prefetch = 0 : i64, scratch_operands = 0 : i64, tpu.core_type = #tpu.core_type<tc>, window_params = [{transform_indices = @transform_0, window_bounds = array<i64: 8, 12>}, {transform_indices = @transform_1, window_bounds = array<i64: 8, 4>}, {pipeline_mode = #tpu.pipeline_mode<synchronous>, transform_indices = @transform_2, window_bounds = array<i64: 12, 32>}, {pipeline_mode = #tpu.pipeline_mode<synchronous>, transform_indices = @transform_3, window_bounds = array<i64: 4, 32>}, {pipeline_mode = #tpu.pipeline_mode<synchronous>, transform_indices = @transform_4, window_bounds = array<i64: 2, 32>}, {pipeline_mode = #tpu.pipeline_mode<synchronous>, transform_indices = @transform_5, window_bounds = array<i64: 32, 32>}, {pipeline_mode = #tpu.pipeline_mode<synchronous>, transform_indices = @transform_6, window_bounds = array<i64: 1, 32>}, {transform_indices = @transform_7, window_bounds = array<i64: 1>}, {transform_indices = @transform_8, window_bounds = array<i64: 1, 8>}]} {
    %c0 = arith.constant 0 : index
    %c0_0 = arith.constant 0 : index
    %0 = vector.load %arg5[%c0, %c0_0] : memref<2x32xf32, #tpu.memory_space<vmem>>, vector<2x32xf32>
    %1 = vector.extract_strided_slice %0 {offsets = [0, 0], sizes = [1, 32], strides = [1, 1]} : vector<2x32xf32> to vector<1x32xf32>
    %2 = vector.extract_strided_slice %0 {offsets = [1, 0], sizes = [1, 32], strides = [1, 1]} : vector<2x32xf32> to vector<1x32xf32>
    %c0_1 = arith.constant 0 : index
    %c0_2 = arith.constant 0 : index
    %3 = vector.load %arg1[%c0_1, %c0_2] : memref<8x12xf32, #tpu.memory_space<vmem>>, vector<8x12xf32>
    %c0_3 = arith.constant 0 : index
    %c0_4 = arith.constant 0 : index
    %4 = vector.load %arg3[%c0_3, %c0_4] : memref<12x32xf32, #tpu.memory_space<vmem>>, vector<12x32xf32>
    %cst = arith.constant dense<0.000000e+00> : vector<8x32xf32>
    %5 = tpu.matmul %3, %4, %cst {dimension_numbers = #tpu.dot_dimension_numbers<[1], [0], [0], [1], [0, 0, 1, 1], [], []>} : vector<8x12xf32>, vector<12x32xf32>, vector<8x32xf32> -> vector<8x32xf32>
    %c0_5 = arith.constant 0 : index
    %c0_6 = arith.constant 0 : index
    %6 = vector.load %arg2[%c0_5, %c0_6] : memref<8x4xf32, #tpu.memory_space<vmem>>, vector<8x4xf32>
    %c0_7 = arith.constant 0 : index
    %c0_8 = arith.constant 0 : index
    %7 = vector.load %arg4[%c0_7, %c0_8] : memref<4x32xf32, #tpu.memory_space<vmem>>, vector<4x32xf32>
    %cst_9 = arith.constant dense<0.000000e+00> : vector<8x32xf32>
    %8 = tpu.matmul %6, %7, %cst_9 {dimension_numbers = #tpu.dot_dimension_numbers<[1], [0], [0], [1], [0, 0, 1, 1], [], []>} : vector<8x4xf32>, vector<4x32xf32>, vector<8x32xf32> -> vector<8x32xf32>
    %9 = arith.addf %5, %8 : vector<8x32xf32>
    %10 = vector.broadcast %1 : vector<1x32xf32> to vector<8x32xf32>
    %11 = arith.addf %9, %10 : vector<8x32xf32>
    %cst_10 = arith.constant 0.000000e+00 : f32
    %12 = vector.broadcast %cst_10 : f32 to vector<8x32xf32>
    %13 = arith.maximumf %11, %12 : vector<8x32xf32>
    %c0_11 = arith.constant 0 : index
    %c0_12 = arith.constant 0 : index
    %14 = vector.load %arg6[%c0_11, %c0_12] : memref<32x32xf32, #tpu.memory_space<vmem>>, vector<32x32xf32>
    %cst_13 = arith.constant dense<0.000000e+00> : vector<8x32xf32>
    %15 = tpu.matmul %13, %14, %cst_13 {dimension_numbers = #tpu.dot_dimension_numbers<[1], [0], [0], [1], [0, 0, 1, 1], [], []>} : vector<8x32xf32>, vector<32x32xf32>, vector<8x32xf32> -> vector<8x32xf32>
    %16 = vector.broadcast %2 : vector<1x32xf32> to vector<8x32xf32>
    %17 = arith.addf %15, %16 : vector<8x32xf32>
    %cst_14 = arith.constant 0.000000e+00 : f32
    %18 = vector.broadcast %cst_14 : f32 to vector<8x32xf32>
    %19 = arith.maximumf %17, %18 : vector<8x32xf32>
    %c0_15 = arith.constant 0 : index
    %c0_16 = arith.constant 0 : index
    %20 = vector.load %arg7[%c0_15, %c0_16] : memref<1x32xf32, #tpu.memory_space<vmem>>, vector<1x32xf32>
    %cst_17 = arith.constant dense<0.000000e+00> : vector<1x8xf32>
    %21 = tpu.matmul %20, %19, %cst_17 {dimension_numbers = #tpu.dot_dimension_numbers<[1], [1], [0], [0], [0, 0, 1, 0], [], []>} : vector<1x32xf32>, vector<8x32xf32>, vector<1x8xf32> -> vector<1x8xf32>
    %c0_18 = arith.constant 0 : index
    %22 = memref.load %arg8[%c0_18] : memref<1xf32, #tpu.memory_space<smem>>
    %23 = vector.broadcast %22 : f32 to vector<1x8xf32>
    %24 = arith.addf %21, %23 : vector<1x8xf32>
    %c0_19 = arith.constant 0 : index
    %c0_20 = arith.constant 0 : index
    %25 = vector.load %arg9[%c0_19, %c0_20] : memref<1x8xf32, #tpu.memory_space<vmem>>, vector<1x8xf32>
    tpu.vector_store %arg9[%c0_19, %c0_20], %24 {strides = array<i32>} : memref<1x8xf32, #tpu.memory_space<vmem>>, vector<1x8xf32>,
    return
  }
  func.func @transform_0(%arg0: i32) -> (i32, i32) {
    %c0_i32 = arith.constant 0 : i32
    %c0_i32_0 = arith.constant 0 : i32
    return %arg0, %c0_i32 : i32, i32
  }
  func.func @transform_1(%arg0: i32) -> (i32, i32) {
    %c0_i32 = arith.constant 0 : i32
    %c0_i32_0 = arith.constant 0 : i32
    return %arg0, %c0_i32 : i32, i32
  }
  func.func @transform_2(%arg0: i32) -> (i32, i32) {
    %c0_i32 = arith.constant 0 : i32
    %c0_i32_0 = arith.constant 0 : i32
    %c0_i32_1 = arith.constant 0 : i32
    return %c0_i32, %c0_i32_0 : i32, i32
  }
  func.func @transform_3(%arg0: i32) -> (i32, i32) {
    %c0_i32 = arith.constant 0 : i32
    %c0_i32_0 = arith.constant 0 : i32
    %c0_i32_1 = arith.constant 0 : i32
    return %c0_i32, %c0_i32_0 : i32, i32
  }
  func.func @transform_4(%arg0: i32) -> (i32, i32) {
    %c0_i32 = arith.constant 0 : i32
    %c0_i32_0 = arith.constant 0 : i32
    %c0_i32_1 = arith.constant 0 : i32
    return %c0_i32, %c0_i32_0 : i32, i32
  }
  func.func @transform_5(%arg0: i32) -> (i32, i32) {
    %c0_i32 = arith.constant 0 : i32
    %c0_i32_0 = arith.constant 0 : i32
    %c0_i32_1 = arith.constant 0 : i32
    return %c0_i32, %c0_i32_0 : i32, i32
  }
  func.func @transform_6(%arg0: i32) -> (i32, i32) {
    %c0_i32 = arith.constant 0 : i32
    %c0_i32_0 = arith.constant 0 : i32
    %c0_i32_1 = arith.constant 0 : i32
    return %c0_i32, %c0_i32_0 : i32, i32
  }
  func.func @transform_7(%arg0: i32) -> i32 {
    %c0_i32 = arith.constant 0 : i32
    %c0_i32_0 = arith.constant 0 : i32
    return %c0_i32 : i32
  }
  func.func @transform_8(%arg0: i32) -> (i32, i32) {
    %c0_i32 = arith.constant 0 : i32
    %c0_i32_0 = arith.constant 0 : i32
    return %c0_i32, %arg0 : i32, i32
  }
}

</mosaic_0001>

<llo_original>
// kernel: tpu_custom_call.1
$region0: #{tpu_custom_call.1}
  #allocation0 [shape = 'u32[]', space=smem, size = 0x4, offset = 0x4, fixed_abs, tag = 'smem constant byte address 0x4 - core index']
  #allocation1 [shape = 'u32[144,128]{1,0:T(1,128)}', space=vmem, size = 0x12000, scoped, tag = 'internal scratch']
  #allocation2 [shape = 'f32[1]{0:T(128)S(6)}', space=smem, size = 0x200, scoped, tag = 'scoped memory for tpu_custom_call.1']
  %s0 = inlined_call_operand.hbm [shape: f32[8,12], index: 0, kind: input, shape index: {}]
  %s1 = inlined_call_operand.vmem [shape: f32[8,4], index: 1, kind: input, shape index: {}]
  %s2 = inlined_call_operand.hbm [shape: f32[12,32], index: 2, kind: input, shape index: {}]
  %s3 = inlined_call_operand.hbm [shape: f32[4,32], index: 3, kind: input, shape index: {}]
  %s4 = inlined_call_operand.vmem [shape: f32[2,32], index: 4, kind: input, shape index: {}]
  %s5 = inlined_call_operand.vmem [shape: f32[32,32], index: 5, kind: input, shape index: {}]
  %s6 = inlined_call_operand.vmem [shape: f32[1,32], index: 6, kind: input, shape index: {}]
  %s7 = inlined_call_operand.<no memory space> [shape: f32[1], index: 7, kind: input, shape index: {}]
  %s8 = inlined_call_operand.hbm [shape: f32[1,8], index: 8, kind: output, shape index: {}]
  %s9 = sld [smem:[#allocation0]]
  $region54: #{tpu_custom_call.1} parent=0
    _
  %s11 = ssub.s32 1, %s9
  %s12 = scalar_select 0, %s11, %s9
  %13 = sst [smem:[#allocation2]] %s7
  $region1: #{tpu_custom_call.1} parent=0
    #allocation3 [shape = 'u8[4096]{0}', space=vmem, size = 0x1000, scoped, tag = 'input window, operand 0, single buffered']
    #allocation4 [shape = 's32[1]{0}', space=sflag, size = 0x4, scoped, tag = 'scoped memory for tpu_custom_call.1']
    #allocation5 [shape = 's32[1]{0}', space=sflag, size = 0x4, scoped, tag = 'scoped memory for tpu_custom_call.1']
    #allocation6 [shape = 'u8[8192]{0}', space=vmem, size = 0x2000, scoped, tag = 'input window, operand 2, single buffered']
    #allocation7 [shape = 's32[1]{0}', space=sflag, size = 0x4, scoped, tag = 'scoped memory for tpu_custom_call.1']
    #allocation8 [shape = 'u8[2048]{0}', space=vmem, size = 0x800, scoped, tag = 'input window, operand 3, single buffered']
    #allocation9 [shape = 'u8[512]{0}', space=vmem, size = 0x400, scoped, tag = 'output window, operand 0, single buffered']
    %14 = vsyncpa [#allocation4], 0
    %15 = vsyncpa [#allocation7], 0
    %16 = vsyncpa [#allocation5], 0
    // Predicated region
    $region2: #{tpu_custom_call.1} parent=1 // pred_check
      _
    $region3: #{tpu_custom_call.1} parent=1 // pred_check_branch
      %18 = sbr.rel (0) target = $region5
    $region4: #{tpu_custom_call.1} parent=1 // pred_region
      %s20 = ssub.s32 128, 128
      %21 = vsyncadd [#allocation4], %s20
      %s23 = sshll.u32 [#allocation3], 4
      %s24 = int_to_ptr.vmem [resolvable:$true] %s23
      %26 = dma.hbm_to_vmem [thread:$0]  %s0, 128, %s24, [#allocation4]
    $region5: #{tpu_custom_call.1} parent=1 // pred_fallthru
      _
    // Predicated region
    $region6: #{tpu_custom_call.1} parent=1 // pred_check
      _
    $region7: #{tpu_custom_call.1} parent=1 // pred_check_branch
      %28 = sbr.rel (0) target = $region9
    $region8: #{tpu_custom_call.1} parent=1 // pred_region
      _
    $region9: #{tpu_custom_call.1} parent=1 // pred_fallthru
      _
    // Predicated region
    $region10: #{tpu_custom_call.1} parent=1 // pred_check
      _
    $region11: #{tpu_custom_call.1} parent=1 // pred_check_branch
      %30 = sbr.rel (0) target = $region13
    $region12: #{tpu_custom_call.1} parent=1 // pred_region
      %s32 = ssub.s32 256, 256
      %33 = vsyncadd [#allocation7], %s32
      %s34 = sshll.u32 [#allocation6], 4
      %s35 = int_to_ptr.vmem [resolvable:$true] %s34
      %40 = dma.hbm_to_vmem [thread:$0]  %s2, 256, %s35, [#allocation7], 128, 128, 8
    $region13: #{tpu_custom_call.1} parent=1 // pred_fallthru
      _
    // Predicated region
    $region14: #{tpu_custom_call.1} parent=1 // pred_check
      _
    $region15: #{tpu_custom_call.1} parent=1 // pred_check_branch
      %42 = sbr.rel (0) target = $region17
    $region16: #{tpu_custom_call.1} parent=1 // pred_region
      %s44 = ssub.s32 64, 64
      %45 = vsyncadd [#allocation7], %s44
      %s47 = sshll.u32 [#allocation8], 4
      %s48 = int_to_ptr.vmem [resolvable:$true] %s47
      %50 = dma.hbm_to_vmem [thread:$0]  %s3, 64, %s48, [#allocation7]
    $region17: #{tpu_custom_call.1} parent=1 // pred_fallthru
      _
    // Predicated region
    $region18: #{tpu_custom_call.1} parent=1 // pred_check
      _
    $region19: #{tpu_custom_call.1} parent=1 // pred_check_branch
      %52 = sbr.rel (0) target = $region21
    $region20: #{tpu_custom_call.1} parent=1 // pred_region
      _
    $region21: #{tpu_custom_call.1} parent=1 // pred_fallthru
      _
    // Predicated region
    $region22: #{tpu_custom_call.1} parent=1 // pred_check
      _
    $region23: #{tpu_custom_call.1} parent=1 // pred_check_branch
      %54 = sbr.rel (0) target = $region25
    $region24: #{tpu_custom_call.1} parent=1 // pred_region
      _
    $region25: #{tpu_custom_call.1} parent=1 // pred_fallthru
      _
    // Predicated region
    $region26: #{tpu_custom_call.1} parent=1 // pred_check
      _
    $region27: #{tpu_custom_call.1} parent=1 // pred_check_branch
      %56 = sbr.rel (0) target = $region29
    $region28: #{tpu_custom_call.1} parent=1 // pred_region
      _
    $region29: #{tpu_custom_call.1} parent=1 // pred_fallthru
      _
    // Predicated region
    $region30: #{tpu_custom_call.1} parent=1 // pred_check
      _
    $region31: #{tpu_custom_call.1} parent=1 // pred_check_branch
      %58 = sbr.rel (0) target = $region33
    $region32: #{tpu_custom_call.1} parent=1 // pred_region
      _
    $region33: #{tpu_custom_call.1} parent=1 // pred_fallthru
      _
    // Predicated region
    $region34: #{tpu_custom_call.1} parent=1 // pred_check
      _
    $region35: #{tpu_custom_call.1} parent=1 // pred_check_branch
      %60 = sbr.rel (0) target = $region37
    $region36: #{tpu_custom_call.1} parent=1 // pred_region
      %61 = dma.done [#allocation4], 128
    $region37: #{tpu_custom_call.1} parent=1 // pred_fallthru
      _
    // Predicated region
    $region38: #{tpu_custom_call.1} parent=1 // pred_check
      _
    $region39: #{tpu_custom_call.1} parent=1 // pred_check_branch
      %63 = sbr.rel (0) target = $region41
    $region40: #{tpu_custom_call.1} parent=1 // pred_region
      %64 = dma.done [#allocation7], 256
    $region41: #{tpu_custom_call.1} parent=1 // pred_fallthru
      _
    // Predicated region
    $region42: #{tpu_custom_call.1} parent=1 // pred_check
      _
    $region43: #{tpu_custom_call.1} parent=1 // pred_check_branch
      %66 = sbr.rel (0) target = $region45
    $region44: #{tpu_custom_call.1} parent=1 // pred_region
      %67 = dma.done [#allocation7], 64
    $region45: #{tpu_custom_call.1} parent=1 // pred_fallthru
      _
    %v68 = vld [vmem:[%s4] sm:$0x3]
    %v69 = vld [vmem:[#allocation3] sm:$0xff]
    %v70 = vld [vmem:[#allocation6] sm:$0xff]
    %v71 = vld [vmem:[#allocation6 + $0x8] sm:$0xf]
    %v72 = vld [vmem:[%s1] sm:$0xff]
    %v73 = vld [vmem:[#allocation8] sm:$0xf]
    %vm74 = vcmask 31744
    %v76 = vsel %vm74, %v72, 0
    %vm78 = vcmask 1043456
    %v80 = vsel %vm78, %v73, 0
    %82 = vmatprep.subr.mxu0 0.0
    %83 = vmatpush1.msra.mxu0 %v80
    %84 = vmatprep.subr.mxu0 0.0
    %85 = vmatpush1.msra.mxu0 0.0
    %86 = vmatprep.subr.mxu0 0.0
    %87 = vmatpush1.msra.mxu0 0.0
    %88 = vmatprep.subr.mxu0 0.0
    %89 = vmatpush1.msra.mxu0 0.0
    %90 = vmatprep.subr.mxu0 0.0
    %91 = vmatpush1.msra.mxu0 0.0
    %92 = vmatprep.subr.mxu0 0.0
    %93 = vmatpush1.msra.mxu0 0.0
    %94 = vmatprep.subr.mxu0 0.0
    %95 = vmatpush1.msra.mxu0 0.0
    %96 = vmatprep.subr.mxu0 0.0
    %97 = vmatpush1.msra.mxu0 0.0
    %98 = vmatprep.subr.mxu0 0.0
    %99 = vmatpush1.msra.mxu0 0.0
    %100 = vmatprep.subr.mxu0 0.0
    %101 = vmatpush1.msra.mxu0 0.0
    %102 = vmatprep.subr.mxu0 0.0
    %103 = vmatpush1.msra.mxu0 0.0
    %104 = vmatprep.subr.mxu0 0.0
    %105 = vmatpush1.msra.mxu0 0.0
    %106 = vmatprep.subr.mxu0 0.0
    %107 = vmatpush1.msra.mxu0 0.0
    %108 = vmatprep.subr.mxu0 0.0
    %109 = vmatpush1.msra.mxu0 0.0
    %110 = vmatprep.subr.mxu0 0.0
    %111 = vmatpush1.msra.mxu0 0.0
    %112 = vmatprep.subr.mxu0 0.0
    %113 = vmatpush1.msra.mxu0 0.0
    %114 = vmatprep.subr.mxu0 0.0
    %115 = vmatpush1.msra.mxu0 0.0
    %116 = vmatprep.subr.mxu0 0.0
    %117 = vmatpush1.msra.mxu0 0.0
    %118 = vmatprep.subr.mxu0 0.0
    %119 = vmatpush1.msra.mxu0 0.0
    %120 = vmatprep.subr.mxu0 0.0
    %121 = vmatpush1.msra.mxu0 0.0
    %122 = vmatprep.subr.mxu0 0.0
    %123 = vmatpush1.msra.mxu0 0.0
    %124 = vmatprep.subr.mxu0 0.0
    %125 = vmatpush1.msra.mxu0 0.0
    %126 = vmatprep.subr.mxu0 0.0
    %127 = vmatpush1.msra.mxu0 0.0
    %128 = vmatprep.subr.mxu0 0.0
    %129 = vmatpush1.msra.mxu0 0.0
    %130 = vmatprep.subr.mxu0 0.0
    %131 = vmatpush1.msra.mxu0 0.0
    %132 = vmatprep.subr.mxu0 0.0
    %133 = vmatpush1.msra.mxu0 0.0
    %134 = vmatprep.subr.mxu0 0.0
    %135 = vmatpush1.msra.mxu0 0.0
    %136 = vmatprep.subr.mxu0 0.0
    %137 = vmatpush1.msra.mxu0 0.0
    %138 = vmatprep.subr.mxu0 0.0
    %139 = vmatpush1.msra.mxu0 0.0
    %140 = vmatprep.subr.mxu0 0.0
    %141 = vmatpush1.msra.mxu0 0.0
    %142 = vmatprep.subr.mxu0 0.0
    %143 = vmatpush1.msra.mxu0 0.0
    %144 = vmatprep.subr.mxu0 0.0
    %145 = vmatpush1.msra.mxu0 0.0
    %146 = vmatprep.mubr.f32.mxu0 0.0
    %147 = vmatmul.mubr.f32.gmra.mrb[0].mxu0 %v76
    %v148 = vpop.f32.mrb[0].mxu0
    %v149 = vadd.f32 0.0, %v148
    %v150 = vpop.f32.mrb[0].mxu0
    %151 = vdwg.mxu0
    %vm152 = vcmask 97280
    %v154 = vsel %vm152, %v69, 0
    %v157 = vsel %vm78, %v71, 0
    %159 = vmatprep.subr.mxu0 0.0
    %160 = vmatpush1.msra.mxu0 %v70
    %161 = vmatprep.subr.mxu0 0.0
    %162 = vmatpush1.msra.mxu0 %v157
    %163 = vmatprep.subr.mxu0 0.0
    %164 = vmatpush1.msra.mxu0 0.0
    %165 = vmatprep.subr.mxu0 0.0
    %166 = vmatpush1.msra.mxu0 0.0
    %167 = vmatprep.subr.mxu0 0.0
    %168 = vmatpush1.msra.mxu0 0.0
    %169 = vmatprep.subr.mxu0 0.0
    %170 = vmatpush1.msra.mxu0 0.0
    %171 = vmatprep.subr.mxu0 0.0
    %172 = vmatpush1.msra.mxu0 0.0
    %173 = vmatprep.subr.mxu0 0.0
    %174 = vmatpush1.msra.mxu0 0.0
    %175 = vmatprep.subr.mxu0 0.0
    %176 = vmatpush1.msra.mxu0 0.0
    %177 = vmatprep.subr.mxu0 0.0
    %178 = vmatpush1.msra.mxu0 0.0
    %179 = vmatprep.subr.mxu0 0.0
    %180 = vmatpush1.msra.mxu0 0.0
    %181 = vmatprep.subr.mxu0 0.0
    %182 = vmatpush1.msra.mxu0 0.0
    %183 = vmatprep.subr.mxu0 0.0
    %184 = vmatpush1.msra.mxu0 0.0
    %185 = vmatprep.subr.mxu0 0.0
    %186 = vmatpush1.msra.mxu0 0.0
    %187 = vmatprep.subr.mxu0 0.0
    %188 = vmatpush1.msra.mxu0 0.0
    %189 = vmatprep.subr.mxu0 0.0
    %190 = vmatpush1.msra.mxu0 0.0
    %191 = vmatprep.subr.mxu0 0.0
    %192 = vmatpush1.msra.mxu0 0.0
    %193 = vmatprep.subr.mxu0 0.0
    %194 = vmatpush1.msra.mxu0 0.0
    %195 = vmatprep.subr.mxu0 0.0
    %196 = vmatpush1.msra.mxu0 0.0
    %197 = vmatprep.subr.mxu0 0.0
    %198 = vmatpush1.msra.mxu0 0.0
    %199 = vmatprep.subr.mxu0 0.0
    %200 = vmatpush1.msra.mxu0 0.0
    %201 = vmatprep.subr.mxu0 0.0
    %202 = vmatpush1.msra.mxu0 0.0
    %203 = vmatprep.subr.mxu0 0.0
    %204 = vmatpush1.msra.mxu0 0.0
    %205 = vmatprep.subr.mxu0 0.0
    %206 = vmatpush1.msra.mxu0 0.0
    %207 = vmatprep.subr.mxu0 0.0
    %208 = vmatpush1.msra.mxu0 0.0
    %209 = vmatprep.subr.mxu0 0.0
    %210 = vmatpush1.msra.mxu0 0.0
    %211 = vmatprep.subr.mxu0 0.0
    %212 = vmatpush1.msra.mxu0 0.0
    %213 = vmatprep.subr.mxu0 0.0
    %214 = vmatpush1.msra.mxu0 0.0
    %215 = vmatprep.subr.mxu0 0.0
    %216 = vmatpush1.msra.mxu0 0.0
    %217 = vmatprep.subr.mxu0 0.0
    %218 = vmatpush1.msra.mxu0 0.0
    %219 = vmatprep.subr.mxu0 0.0
    %220 = vmatpush1.msra.mxu0 0.0
    %221 = vmatprep.subr.mxu0 0.0
    %222 = vmatpush1.msra.mxu0 0.0
    %223 = vmatprep.mubr.f32.mxu0 0.0
    %224 = vmatmul.mubr.f32.gmra.mrb[0].mxu0 %v154
    %v225 = vpop.f32.mrb[0].mxu0
    %v226 = vadd.f32 %v149, %v225
    %v227 = vpop.f32.mrb[0].mxu0
    %228 = vdwg.mxu0
    %v229 = vlaneseq
    %v230 = vshrl.u32 %v229, 7
    %v231 = vsub.s32 0, %v230
    %v232 = vrot.slane %v68, %v231
    %v233 = vadd.f32 %v226, %v232
    %v234 = vmax.f32 %v233, 0.0
    %v235 = vld [vmem:[%s5] sm:$0xff]
    %v236 = vld [vmem:[%s5 + $0x8] sm:$0xff]
    %v237 = vld [vmem:[%s5 + $0x10] sm:$0xff]
    %v238 = vld [vmem:[%s5 + $0x18] sm:$0xff]
    %v239 = vlaneseq
    %v240 = vshrl.u32 %v239, 7
    %v241 = vsub.s32 1, %v240
    %v242 = vrot.slane %v68, %v241
    %vm243 = vcmask 261120
    %v245 = vsel %vm243, %v234, 0
    %247 = vmatprep.subr.mxu0 0.0
    %248 = vmatpush1.msra.mxu0 %v235
    %249 = vmatprep.subr.mxu0 0.0
    %250 = vmatpush1.msra.mxu0 %v236
    %251 = vmatprep.subr.mxu0 0.0
    %252 = vmatpush1.msra.mxu0 %v237
    %253 = vmatprep.subr.mxu0 0.0
    %254 = vmatpush1.msra.mxu0 %v238
    %255 = vmatprep.subr.mxu0 0.0
    %256 = vmatpush1.msra.mxu0 0.0
    %257 = vmatprep.subr.mxu0 0.0
    %258 = vmatpush1.msra.mxu0 0.0
    %259 = vmatprep.subr.mxu0 0.0
    %260 = vmatpush1.msra.mxu0 0.0
    %261 = vmatprep.subr.mxu0 0.0
    %262 = vmatpush1.msra.mxu0 0.0
    %263 = vmatprep.subr.mxu0 0.0
    %264 = vmatpush1.msra.mxu0 0.0
    %265 = vmatprep.subr.mxu0 0.0
    %266 = vmatpush1.msra.mxu0 0.0
    %267 = vmatprep.subr.mxu0 0.0
    %268 = vmatpush1.msra.mxu0 0.0
    %269 = vmatprep.subr.mxu0 0.0
    %270 = vmatpush1.msra.mxu0 0.0
    %271 = vmatprep.subr.mxu0 0.0
    %272 = vmatpush1.msra.mxu0 0.0
    %273 = vmatprep.subr.mxu0 0.0
    %274 = vmatpush1.msra.mxu0 0.0
    %275 = vmatprep.subr.mxu0 0.0
    %276 = vmatpush1.msra.mxu0 0.0
    %277 = vmatprep.subr.mxu0 0.0
    %278 = vmatpush1.msra.mxu0 0.0
    %279 = vmatprep.subr.mxu0 0.0
    %280 = vmatpush1.msra.mxu0 0.0
    %281 = vmatprep.subr.mxu0 0.0
    %282 = vmatpush1.msra.mxu0 0.0
    %283 = vmatprep.subr.mxu0 0.0
    %284 = vmatpush1.msra.mxu0 0.0
    %285 = vmatprep.subr.mxu0 0.0
    %286 = vmatpush1.msra.mxu0 0.0
    %287 = vmatprep.subr.mxu0 0.0
    %288 = vmatpush1.msra.mxu0 0.0
    %289 = vmatprep.subr.mxu0 0.0
    %290 = vmatpush1.msra.mxu0 0.0
    %291 = vmatprep.subr.mxu0 0.0
    %292 = vmatpush1.msra.mxu0 0.0
    %293 = vmatprep.subr.mxu0 0.0
    %294 = vmatpush1.msra.mxu0 0.0
    %295 = vmatprep.subr.mxu0 0.0
    %296 = vmatpush1.msra.mxu0 0.0
    %297 = vmatprep.subr.mxu0 0.0
    %298 = vmatpush1.msra.mxu0 0.0
    %299 = vmatprep.subr.mxu0 0.0
    %300 = vmatpush1.msra.mxu0 0.0
    %301 = vmatprep.subr.mxu0 0.0
    %302 = vmatpush1.msra.mxu0 0.0
    %303 = vmatprep.subr.mxu0 0.0
    %304 = vmatpush1.msra.mxu0 0.0
    %305 = vmatprep.subr.mxu0 0.0
    %306 = vmatpush1.msra.mxu0 0.0
    %307 = vmatprep.subr.mxu0 0.0
    %308 = vmatpush1.msra.mxu0 0.0
    %309 = vmatprep.subr.mxu0 0.0
    %310 = vmatpush1.msra.mxu0 0.0
    %311 = vmatprep.mubr.f32.mxu0 0.0
    %312 = vmatmul.mubr.f32.gmra.mrb[0].mxu0 %v245
    %v313 = vpop.f32.mrb[0].mxu0
    %v314 = vadd.f32 %v242, %v313
    %v315 = vpop.f32.mrb[0].mxu0
    %316 = vdwg.mxu0
    %v317 = vmax.f32 %v314, 0.0
    %v318 = vld [vmem:[%s6] sm:$0x1]
    %s319 = sld [smem:[#allocation2]]
    %v320 = vstv %s319
    %v322 = vsel %vm243, %v318, 0
    %v325 = vsel %vm243, %v317, 0
    %327 = vmatprep.subr.mxu0 0.0
    %328 = vmatpush1.xpose.msra.mxu0 %v325
    %329 = vmatprep.subr.mxu0 0.0
    %330 = vmatpush1.xpose.msra.mxu0 0.0
    %331 = vmatprep.subr.mxu0 0.0
    %332 = vmatpush1.xpose.msra.mxu0 0.0
    %333 = vmatprep.subr.mxu0 0.0
    %334 = vmatpush1.xpose.msra.mxu0 0.0
    %335 = vmatprep.subr.mxu0 0.0
    %336 = vmatpush1.xpose.msra.mxu0 0.0
    %337 = vmatprep.subr.mxu0 0.0
    %338 = vmatpush1.xpose.msra.mxu0 0.0
    %339 = vmatprep.subr.mxu0 0.0
    %340 = vmatpush1.xpose.msra.mxu0 0.0
    %341 = vmatprep.subr.mxu0 0.0
    %342 = vmatpush1.xpose.msra.mxu0 0.0
    %343 = vmatprep.subr.mxu0 0.0
    %344 = vmatpush1.xpose.msra.mxu0 0.0
    %345 = vmatprep.subr.mxu0 0.0
    %346 = vmatpush1.xpose.msra.mxu0 0.0
    %347 = vmatprep.subr.mxu0 0.0
    %348 = vmatpush1.xpose.msra.mxu0 0.0
    %349 = vmatprep.subr.mxu0 0.0
    %350 = vmatpush1.xpose.msra.mxu0 0.0
    %351 = vmatprep.subr.mxu0 0.0
    %352 = vmatpush1.xpose.msra.mxu0 0.0
    %353 = vmatprep.subr.mxu0 0.0
    %354 = vmatpush1.xpose.msra.mxu0 0.0
    %355 = vmatprep.subr.mxu0 0.0
    %356 = vmatpush1.xpose.msra.mxu0 0.0
    %357 = vmatprep.subr.mxu0 0.0
    %358 = vmatpush1.xpose.msra.mxu0 0.0
    %359 = vmatprep.subr.mxu0 0.0
    %360 = vmatpush1.xpose.msra.mxu0 0.0
    %361 = vmatprep.subr.mxu0 0.0
    %362 = vmatpush1.xpose.msra.mxu0 0.0
    %363 = vmatprep.subr.mxu0 0.0
    %364 = vmatpush1.xpose.msra.mxu0 0.0
    %365 = vmatprep.subr.mxu0 0.0
    %366 = vmatpush1.xpose.msra.mxu0 0.0
    %367 = vmatprep.subr.mxu0 0.0
    %368 = vmatpush1.xpose.msra.mxu0 0.0
    %369 = vmatprep.subr.mxu0 0.0
    %370 = vmatpush1.xpose.msra.mxu0 0.0
    %371 = vmatprep.subr.mxu0 0.0
    %372 = vmatpush1.xpose.msra.mxu0 0.0
    %373 = vmatprep.subr.mxu0 0.0
    %374 = vmatpush1.xpose.msra.mxu0 0.0
    %375 = vmatprep.subr.mxu0 0.0
    %376 = vmatpush1.xpose.msra.mxu0 0.0
    %377 = vmatprep.subr.mxu0 0.0
    %378 = vmatpush1.xpose.msra.mxu0 0.0
    %379 = vmatprep.subr.mxu0 0.0
    %380 = vmatpush1.xpose.msra.mxu0 0.0
    %381 = vmatprep.subr.mxu0 0.0
    %382 = vmatpush1.xpose.msra.mxu0 0.0
    %383 = vmatprep.subr.mxu0 0.0
    %384 = vmatpush1.xpose.msra.mxu0 0.0
    %385 = vmatprep.subr.mxu0 0.0
    %386 = vmatpush1.xpose.msra.mxu0 0.0
    %387 = vmatprep.subr.mxu0 0.0
    %388 = vmatpush1.xpose.msra.mxu0 0.0
    %389 = vmatprep.subr.mxu0 0.0
    %390 = vmatpush1.xpose.msra.mxu0 0.0
    %391 = vmatprep.mubr.f32.mxu0 0.0
    %392 = vmatmul.mubr.f32.gmra.mrb[0].mxu0 %v322
    %v393 = vpop.f32.mrb[0].mxu0
    %v394 = vadd.f32 %v320, %v393
    %v395 = vpop.f32.mrb[0].mxu0
    %396 = vdwg.mxu0
    %vm397 = vcmask 57344
    %398 = vst.msk [vmem:[#allocation9] sm:$0x1] %vm397, %v394
    // Predicated region
    $region46: #{tpu_custom_call.1} parent=1 // pred_check
      _
    $region47: #{tpu_custom_call.1} parent=1 // pred_check_branch
      %400 = sbr.rel (0) target = $region49
    $region48: #{tpu_custom_call.1} parent=1 // pred_region
      %s402 = ssub.s32 16, 16
      %403 = vsyncadd [#allocation5], %s402
      %s405 = sshll.u32 [#allocation9], 4
      %s406 = int_to_ptr.vmem [resolvable:$true] %s405
      %408 = dma.vmem_to_hbm [thread:$0]  %s406, 16, %s8, [#allocation5]
    $region49: #{tpu_custom_call.1} parent=1 // pred_fallthru
      _
    // Predicated region
    $region50: #{tpu_custom_call.1} parent=1 // pred_check
      _
    $region51: #{tpu_custom_call.1} parent=1 // pred_check_branch
      %410 = sbr.rel (0) target = $region53
    $region52: #{tpu_custom_call.1} parent=1 // pred_region
      %411 = dma.done [#allocation5], 16
    $region53: #{tpu_custom_call.1} parent=1 // pred_fallthru
      _
    %412 = vsyncpa [#allocation4], 1
    %413 = vsyncpa [#allocation7], 1
    %414 = vsyncpa [#allocation5], 1

</llo_original>
